<compile_context>
chip_gen: v7x
topology: tpu7x:2x2x1
jax: 0.10.0
libtpu: 0.0.40
codegen_flags: <defaults>
</compile_context>

<pallas_src>
import jax
import jax.numpy as jnp
from jax.experimental import pallas as pl
from jax.experimental.pallas import tpu as pltpu

_LANE = 128
_BLOCK_BYTES = 4 * 1024 * 1024        # per-buffer block target (v5e/v6e)
_BLOCK_BYTES_V7X = 8 * 1024 * 1024    # bigger blocks: halves per-step overhead at 3.2 TB/s
_VMEM_LIMIT_BYTES = 32 * 1024 * 1024      # 2 in + 2 out 4 MiB buffers + headroom
_VMEM_LIMIT_BYTES_V7X = 48 * 1024 * 1024  # 2 in + 2 out 8 MiB buffers, < 64 MiB physical
_MIN_BLOCKS_V7X = 6                   # >= 3 grid steps per TensorCore on v7x
_SPLIT_MIN_BYTES = 1 << 20            # only bother splitting inputs >= 1 MiB


def _square_kernel(x_ref, o_ref):
    # Elementwise hot path: o = x * x on the VPU (purely HBM-bandwidth bound).
    v = x_ref[...]
    o_ref[...] = v * v


def _round_up(v: int, m: int) -> int:
    return -(-v // m) * m


def _is_v7x() -> bool:
    try:
        kind = jax.devices()[0].device_kind.lower()
    except Exception:
        return False
    return "v7" in kind or "tpu7" in kind


def _choose_view(n: int, itemsize: int) -> tuple[int, int]:
    """Zero-copy (rows, cols) factorization of a flat length-n array."""
    sub = max(8, 32 // itemsize)  # sublane granularity: 8 f32, 16 bf16, 32 int8

    if n % _LANE == 0:
        # Lane-dense view: widest multiple-of-128 cols that keeps rows >= sub
        # (e.g. 4096 f32 elements -> (8, 512), not (1, 4096)).
        for cols in (4096, 2048, 1024, 512, 256, 128):
            if n % cols == 0 and n // cols >= sub:
                return n // cols, cols
        return n // _LANE, _LANE

    # Misaligned total size (rare and small in practice): pick the divisor of n
    # (<= 4096) with the best combined lane x sublane utilization.  Still
    # zero-copy; partial (8,128) tiles at the edges are masked by Pallas.
    best_cols, best_score = 1, -1.0
    d = 1
    while d * d <= n and d <= 4096:
        if n % d == 0:
            for c in (d, n // d):
                if c <= 4096:
                    lane_util = c / _round_up(c, _LANE)
                    sub_util = min(n // c, sub) / sub
                    score = lane_util * sub_util
                    if score > best_score:
                        best_cols, best_score = c, score
        d += 1
    if best_cols < _LANE and n >= (1 << 16):
        # Pathological factorization (e.g. large prime size): use a single wide
        # row and let _square_2d block along the lane dimension instead.
        return 1, n
    return n // best_cols, best_cols


def _square_2d(x2d: jax.Array) -> jax.Array:
    rows, cols = x2d.shape
    itemsize = jnp.dtype(x2d.dtype).itemsize
    sub = max(8, 32 // itemsize)
    cols_padded = _round_up(cols, _LANE)  # VMEM lane padding for budgeting

    v7x = _is_v7x()
    target_bytes = _BLOCK_BYTES_V7X if v7x else _BLOCK_BYTES
    vmem_limit = _VMEM_LIMIT_BYTES_V7X if v7x else _VMEM_LIMIT_BYTES

    if cols_padded * sub * itemsize > target_bytes:
        # A single sub-row slab is wider than the target: block along lanes too
        # (block_cols is a multiple of 128, final partial column block masked).
        block_cols = max(_LANE, (target_bytes // (sub * itemsize)) // _LANE * _LANE)
        block_rows = min(rows, sub)
    else:
        block_cols = cols
        block_rows = (target_bytes // (cols_padded * itemsize)) // sub * sub
        block_rows = max(sub, block_rows)

    # v7x has two TensorCores: give big inputs >= _MIN_BLOCKS_V7X grid steps so
    # each core's double buffering overlaps DMA-in of i+1 with DMA-out of i.
    total_bytes = rows * cols_padded * itemsize
    if (v7x and block_cols == cols and total_bytes >= _SPLIT_MIN_BYTES
            and rows >= _MIN_BLOCKS_V7X * sub):
        cap = _round_up(pl.cdiv(rows, _MIN_BLOCKS_V7X), sub)
        block_rows = min(block_rows, cap)

    if block_rows >= rows:
        block_rows = rows   # full-extent block is always layout-legal
    if block_cols >= cols:
        block_cols = cols

    grid = (pl.cdiv(rows, block_rows), pl.cdiv(cols, block_cols))
    # TODO(synk): if the caller can donate x, add input_output_aliases={0: 0}
    # to halve peak HBM footprint; the real speedup would come from fusing the
    # square into the producing/consuming op's epilogue (a standalone
    # elementwise square is pinned at 1 read + 1 write of HBM on every TPU
    # generation, so no tiling beats that roofline).
    return pl.pallas_call(
        _square_kernel,
        out_shape=jax.ShapeDtypeStruct((rows, cols), x2d.dtype),
        grid=grid,
        in_specs=[pl.BlockSpec((block_rows, block_cols), lambda i, j: (i, j))],
        out_specs=pl.BlockSpec((block_rows, block_cols), lambda i, j: (i, j)),
        compiler_params=pltpu.CompilerParams(
            dimension_semantics=("parallel", "parallel"),
            vmem_limit_bytes=vmem_limit,
        ),
    )(x2d)


def square_act(x: jax.Array) -> jax.Array:
    """Computes x * x elementwise, matching torch.mul(x, x) semantics."""
    if x.ndim == 0 or x.size == 0:
        return x * x  # degenerate: nothing for a kernel to stream
    rows, cols = _choose_view(x.size, jnp.dtype(x.dtype).itemsize)
    # Contiguous reshapes are bitcasts: no extra HBM pass on either side.
    return _square_2d(x.reshape(rows, cols)).reshape(x.shape)


if __name__ == "__main__":
    key = jax.random.PRNGKey(0)

    # NCHW input, consistent with how this activation is used after convs.
    x = jax.random.normal(key, (2, 4, 16, 16), dtype=jnp.float32)
    y = jax.block_until_ready(square_act(x))
    assert y.shape == x.shape and y.dtype == x.dtype
    assert jnp.allclose(y, x * x, atol=1e-6, rtol=1e-6)

    # Misaligned (non multiple-of-128) size exercises the zero-copy ragged path.
    x2 = jax.random.normal(jax.random.PRNGKey(1), (3, 7, 11), dtype=jnp.float32)
    y2 = jax.block_until_ready(square_act(x2))
    assert y2.shape == x2.shape and y2.dtype == x2.dtype
    assert jnp.allclose(y2, x2 * x2, atol=1e-6, rtol=1e-6)

    print("KERNEL_OK")
</pallas_src>

<mosaic_0001>
module attributes {stable_mosaic.version = 11 : i64} {
  func.func @_square_kernel(%arg0: i32, %arg1: i32, %arg2: memref<8x256xf32, #tpu.memory_space<vmem>>, %arg3: memref<8x256xf32, #tpu.memory_space<vmem>>) attributes {dimension_semantics = [#tpu.dimension_semantics<parallel>, #tpu.dimension_semantics<parallel>], iteration_bounds = array<i64: 1, 1>, scalar_prefetch = 0 : i64, scratch_operands = 0 : i64, tpu.core_type = #tpu.core_type<tc>, window_params = [{transform_indices = @transform_0, window_bounds = array<i64: 8, 256>}, {transform_indices = @transform_1, window_bounds = array<i64: 8, 256>}]} {
    %c0 = arith.constant 0 : index
    %c0_0 = arith.constant 0 : index
    %0 = vector.load %arg2[%c0, %c0_0] : memref<8x256xf32, #tpu.memory_space<vmem>>, vector<8x256xf32>
    %1 = arith.mulf %0, %0 : vector<8x256xf32>
    %c0_1 = arith.constant 0 : index
    %c0_2 = arith.constant 0 : index
    %2 = vector.load %arg3[%c0_1, %c0_2] : memref<8x256xf32, #tpu.memory_space<vmem>>, vector<8x256xf32>
    tpu.vector_store %arg3[%c0_1, %c0_2], %1 {strides = array<i32>} : memref<8x256xf32, #tpu.memory_space<vmem>>, vector<8x256xf32>,
    return
  }
  func.func @transform_0(%arg0: i32, %arg1: i32) -> (i32, i32) {
    %c0_i32 = arith.constant 0 : i32
    return %arg0, %arg1 : i32, i32
  }
  func.func @transform_1(%arg0: i32, %arg1: i32) -> (i32, i32) {
    %c0_i32 = arith.constant 0 : i32
    return %arg0, %arg1 : i32, i32
  }
}

</mosaic_0001>

<llo_original>
// kernel: tpu_custom_call.1
$region0: #{tpu_custom_call.1}
  #allocation0 [shape = 'u32[]', space=smem, size = 0x4, offset = 0x4, fixed_abs, tag = 'smem constant byte address 0x4 - core index']
  #allocation1 [shape = 'u32[144,128]{1,0:T(1,128)}', space=vmem, size = 0x12000, scoped, tag = 'internal scratch']
  %s0 = inlined_call_operand.hbm [shape: f32[8,256], index: 0, kind: input, shape index: {}]
  %s1 = inlined_call_operand.hbm [shape: f32[8,256], index: 1, kind: output, shape index: {}]
  %s2 = sld [smem:[#allocation0]]
  $region18: #{tpu_custom_call.1} parent=0
    _
  %s4 = ssub.s32 1, %s2
  %s5 = scalar_select 0, %s4, %s2
  $region1: #{tpu_custom_call.1} parent=0
    #allocation2 [shape = 'u8[8192]{0}', space=vmem, size = 0x2000, scoped, tag = 'input window, operand 0, single buffered']
    #allocation3 [shape = 's32[1]{0}', space=sflag, size = 0x4, scoped, tag = 'scoped memory for tpu_custom_call.1']
    #allocation4 [shape = 's32[1]{0}', space=sflag, size = 0x4, scoped, tag = 'scoped memory for tpu_custom_call.1']
    #allocation5 [shape = 'u8[8192]{0}', space=vmem, size = 0x2000, scoped, tag = 'output window, operand 0, single buffered']
    %6 = vsyncpa [#allocation3], 0
    %7 = vsyncpa [#allocation4], 0
    // Predicated region
    $region2: #{tpu_custom_call.1} parent=1 // pred_check
      _
    $region3: #{tpu_custom_call.1} parent=1 // pred_check_branch
      %9 = sbr.rel (0) target = $region5
    $region4: #{tpu_custom_call.1} parent=1 // pred_region
      %s11 = ssub.s32 256, 256
      %12 = vsyncadd [#allocation3], %s11
      %s14 = sshll.u32 [#allocation2], 4
      %s15 = int_to_ptr.vmem [resolvable:$true] %s14
      %17 = dma.hbm_to_vmem [thread:$0]  %s0, 256, %s15, [#allocation3]
    $region5: #{tpu_custom_call.1} parent=1 // pred_fallthru
      _
    // Predicated region
    $region6: #{tpu_custom_call.1} parent=1 // pred_check
      _
    $region7: #{tpu_custom_call.1} parent=1 // pred_check_branch
      %19 = sbr.rel (0) target = $region9
    $region8: #{tpu_custom_call.1} parent=1 // pred_region
      %20 = dma.done [#allocation3], 256
    $region9: #{tpu_custom_call.1} parent=1 // pred_fallthru
      _
    %v21 = vld [vmem:[#allocation2] sm:$0xff]
    %v22 = vld [vmem:[#allocation2 + $0x8] sm:$0xff]
    %v23 = vmul.f32 %v21, %v21
    %v24 = vmul.f32 %v22, %v22
    %25 = vst [vmem:[#allocation5] sm:$0xff] %v23
    %26 = vst [vmem:[#allocation5 + $0x8] sm:$0xff] %v24
    // Predicated region
    $region10: #{tpu_custom_call.1} parent=1 // pred_check
      _
    $region11: #{tpu_custom_call.1} parent=1 // pred_check_branch
      %28 = sbr.rel (0) target = $region13
    $region12: #{tpu_custom_call.1} parent=1 // pred_region
      %s30 = ssub.s32 256, 256
      %31 = vsyncadd [#allocation4], %s30
      %s33 = sshll.u32 [#allocation5], 4
      %s34 = int_to_ptr.vmem [resolvable:$true] %s33
      %36 = dma.vmem_to_hbm [thread:$0]  %s34, 256, %s1, [#allocation4]
    $region13: #{tpu_custom_call.1} parent=1 // pred_fallthru
      _
    // Predicated region
    $region14: #{tpu_custom_call.1} parent=1 // pred_check
      _
    $region15: #{tpu_custom_call.1} parent=1 // pred_check_branch
      %38 = sbr.rel (0) target = $region17
    $region16: #{tpu_custom_call.1} parent=1 // pred_region
      %39 = dma.done [#allocation4], 256
    $region17: #{tpu_custom_call.1} parent=1 // pred_fallthru
      _
    %40 = vsyncpa [#allocation3], 1
    %41 = vsyncpa [#allocation4], 1

</llo_original>
